<compile_context>
chip_gen: v7x
topology: tpu7x:2x2x1
jax: 0.10.0
libtpu: 0.0.40
codegen_flags: <defaults>
</compile_context>

<pallas_src>
import functools

import jax
import jax.numpy as jnp
from jax.experimental import pallas as pl
from jax.experimental.pallas import tpu as pltpu

MAX_ATOMIC_NUM = 100          # as in CDVAE / CatalystGen
_ATOM_OUT_PADDED = 128        # lane-dense output width for fc_atom (keep 128, not 256)
_PAD_BIAS = -1e9              # bias on the 28 padded lanes (softmax/argmax-neutral)


def _round_up(x, m):
    return (x + m - 1) // m * m


# ----------------------------------------------------------------------------
# Pallas kernel: row-tiled Linear
#   x (f32, cast to bf16 in-kernel) @ w (bf16)  -> f32 MXU accumulate
#   + bias (f32), stored as bf16.
# ----------------------------------------------------------------------------
def _linear_kernel(x_ref, w_ref, b_ref, o_ref):
    x_bf = x_ref[...].astype(jnp.bfloat16)      # fused cast: free VPU filler under MXU/DMA
    acc = jnp.dot(x_bf, w_ref[...], preferred_element_type=jnp.float32)
    o_ref[...] = (acc + b_ref[...]).astype(o_ref.dtype)


def pallas_linear(x, w_bf16, b_f32, *, row_tile=512, min_grid_steps=4):
    """Row-tiled Linear: [N, d_in] f32 @ [d_in, d_out] bf16 + [1, d_out] f32 -> [N, d_out] bf16.

    - d_out must be a multiple of 128 (weights/bias padded at init) so output
      stores are lane-dense.
    - No wrapper pad/slice: the ragged last row block is masked by Pallas
      (safe: kernel has no cross-row reduction).
    - The row tile is capped so the single "parallel" grid axis keeps at least
      `min_grid_steps` steps (shards work across both v7x TensorCores).
    """
    n, d_in = x.shape
    d_in_w, d_out = w_bf16.shape
    assert d_in == d_in_w and b_f32.shape == (1, d_out)
    assert d_out % 128 == 0, "pad the output feature dim to a multiple of 128"
    assert w_bf16.dtype == jnp.bfloat16 and b_f32.dtype == jnp.float32

    sub = 16  # sublane granule covering both the f32 input (8) and bf16 output (16) tiling
    rt = min(row_tile, max(sub, _round_up(pl.cdiv(n, min_grid_steps), sub)))
    grid = (pl.cdiv(n, rt),)

    return pl.pallas_call(
        _linear_kernel,
        out_shape=jax.ShapeDtypeStruct((n, d_out), jnp.bfloat16),
        grid=grid,
        in_specs=[
            pl.BlockSpec((rt, d_in), lambda i: (i, 0)),      # streaming x row tile
            pl.BlockSpec((d_in, d_out), lambda i: (0, 0)),   # resident weight (bf16)
            pl.BlockSpec((1, d_out), lambda i: (0, 0)),      # resident bias (f32)
        ],
        out_specs=pl.BlockSpec((rt, d_out), lambda i: (i, 0)),
        compiler_params=pltpu.CompilerParams(
            dimension_semantics=("parallel",),
        ),
    )(x, w_bf16, b_f32)


# ----------------------------------------------------------------------------
# Parameters (shapes match the torch module's __init__).
#   fc_atom: padded 100 -> 128 output lanes; weight stored bf16, bias stored
#   f32 with -1e9 on the padded lanes (so 128-wide logits are usable as-is).
#   The three 5-way classifiers are pre-fused into one [hidden, 15] matmul.
# ----------------------------------------------------------------------------
def init_decoder_params(hidden_dim):
    def _wb(key, d_in, d_out):
        kw, kb = jax.random.split(key)
        scale = 1.0 / jnp.sqrt(d_in)
        w = (jax.random.uniform(kw, (d_in, d_out), jnp.float32) * 2.0 - 1.0) * scale
        b = (jax.random.uniform(kb, (1, d_out), jnp.float32) * 2.0 - 1.0) * scale
        return w, b

    k = jax.random.PRNGKey(42)
    k_atom, k_h, k_k, k_l = jax.random.split(k, 4)

    w_a, b_a = _wb(k_atom, hidden_dim, MAX_ATOMIC_NUM)
    w_h, b_h = _wb(k_h, hidden_dim, 5)
    w_k, b_k = _wb(k_k, hidden_dim, 5)
    w_l, b_l = _wb(k_l, hidden_dim, 5)

    pad = _ATOM_OUT_PADDED - MAX_ATOMIC_NUM
    params = {
        # fc_atom: zero weight columns / -1e9 bias on pad lanes; stored in the
        # dtypes the kernel consumes (no per-call casts).
        "fc_atom_w": jnp.pad(w_a, ((0, 0), (0, pad))).astype(jnp.bfloat16),
        "fc_atom_b": jnp.pad(b_a, ((0, 0), (0, pad)),
                             constant_values=_PAD_BIAS).astype(jnp.float32),
        # classifiers fused once at init (hoisted out of the forward hot path).
        "cls_w": jnp.concatenate([w_h, w_k, w_l], axis=1),   # [hidden, 15]
        "cls_b": jnp.concatenate([b_h, b_k, b_l], axis=1),   # [1, 15]
    }
    return params


# ----------------------------------------------------------------------------
# Decoder (post-GemNetT) forward
# ----------------------------------------------------------------------------
@functools.partial(jax.jit, static_argnames=("slice_atom_logits",))
def gemnet_t_decoder_forward(h, pred_cart_coord_diff, graph_repr, params,
                             *, slice_atom_logits=False):
    """GemNetTDecoder.forward semantics given GemNetT backbone outputs.

    Returns (pred_cart_coord_diff, pred_atom_types, (logits_h, logits_k, logits_l)).

    With slice_atom_logits=False (default, fast path), pred_atom_types is the
    128-lane padded bf16 logit tensor; the 28 pad lanes carry a -1e9 bias so
    softmax / argmax semantics are identical to the [N, 100] torch output.
    slice_atom_logits=True returns the exact [N, 100] view (one extra
    lane-unaligned copy pass).
    """
    # --- per-atom head: fc_atom(h), Pallas MXU kernel ---------------------
    atom_logits = pallas_linear(h, params["fc_atom_w"], params["fc_atom_b"])
    if slice_atom_logits:
        pred_atom_types = atom_logits[:, :MAX_ATOMIC_NUM]
    else:
        pred_atom_types = atom_logits

    # --- per-graph heads: tiny (B x 15) fused matmul, plain XLA -----------
    # A pallas_call here would be pure launch/DMA overhead for ~2 KFLOPs.
    logits = graph_repr @ params["cls_w"] + params["cls_b"]          # [B, 15]
    logits_h = logits[:, 0:5]
    logits_k = logits[:, 5:10]
    logits_l = logits[:, 10:15]

    # pred_cart_coord_diff passes through unchanged (as in the torch module).
    return pred_cart_coord_diff, pred_atom_types, (logits_h, logits_k, logits_l)


# ----------------------------------------------------------------------------
# Example / smoke test
# ----------------------------------------------------------------------------
if __name__ == "__main__":
    key = jax.random.PRNGKey(0)
    B = 2            # crystals in the batch
    N = 200          # total atoms across the batch (ragged vs. the row tile)
    HIDDEN = 128     # hidden_dim (module default; lane-aligned)
    LATENT = 256     # latent_dim (module default)

    ks = jax.random.split(key, 8)

    # Module-signature inputs (would feed the untranslated GemNetT backbone).
    z = jax.random.normal(ks[0], (B, LATENT), jnp.float32)
    pred_frac_coords = jax.random.uniform(ks[1], (N, 3), jnp.float32)
    pred_atom_types_in = jax.random.randint(ks[2], (N,), 1, MAX_ATOMIC_NUM + 1)
    num_atoms = jnp.array([100, 100], jnp.int32)
    lengths = jax.random.uniform(ks[3], (B, 3), jnp.float32, 3.0, 8.0)
    angles = jnp.full((B, 3), 90.0, jnp.float32)
    del z, pred_frac_coords, pred_atom_types_in, num_atoms, lengths, angles  # backbone not translated

    # Stand-ins for the GemNetT backbone outputs (deterministic).
    h = jax.random.normal(ks[4], (N, HIDDEN), jnp.float32)
    pred_cart_coord_diff = jax.random.normal(ks[5], (N, 3), jnp.float32)
    graph_repr = jax.random.normal(ks[6], (B, HIDDEN), jnp.float32)

    params = init_decoder_params(HIDDEN)

    # Fast path: 128-wide bf16 logits, no lane-unaligned slice in the hot path.
    out = gemnet_t_decoder_forward(h, pred_cart_coord_diff, graph_repr, params,
                                   slice_atom_logits=False)
    out = jax.block_until_ready(out)
    cart_diff, atom_logits_pad, (lh, lk, ll) = out

    # Torch-shape parity path ([N, 100]).
    out_sliced = gemnet_t_decoder_forward(h, pred_cart_coord_diff, graph_repr, params,
                                          slice_atom_logits=True)
    out_sliced = jax.block_until_ready(out_sliced)
    _, atom_logits, _ = out_sliced

    # --- reference checks -------------------------------------------------
    # Atom head: bf16 operands / f32 accumulation / bf16 store. Compare against
    # an f32 matmul of bf16-rounded inputs.
    h_bf = h.astype(jnp.bfloat16).astype(jnp.float32)
    w_bf = params["fc_atom_w"].astype(jnp.float32)
    ref_full = h_bf @ w_bf + params["fc_atom_b"]
    ref_atom = ref_full[:, :MAX_ATOMIC_NUM]

    ref_logits = graph_repr @ params["cls_w"] + params["cls_b"]
    ref_h, ref_k, ref_l = ref_logits[:, 0:5], ref_logits[:, 5:10], ref_logits[:, 10:15]

    assert cart_diff.shape == (N, 3)
    assert atom_logits_pad.shape == (N, _ATOM_OUT_PADDED)
    assert atom_logits_pad.dtype == jnp.bfloat16
    assert atom_logits.shape == (N, MAX_ATOMIC_NUM)
    assert lh.shape == (B, 5) and lk.shape == (B, 5) and ll.shape == (B, 5)

    assert jnp.allclose(atom_logits.astype(jnp.float32), ref_atom, atol=3e-2, rtol=3e-2)
    assert jnp.allclose(atom_logits_pad[:, :MAX_ATOMIC_NUM].astype(jnp.float32), ref_atom,
                        atol=3e-2, rtol=3e-2)
    # Padded lanes carry the large negative bias -> softmax/argmax-neutral.
    assert bool(jnp.all(atom_logits_pad[:, MAX_ATOMIC_NUM:].astype(jnp.float32) < -1e8))
    assert bool(jnp.all(jnp.argmax(atom_logits_pad, axis=-1) ==
                        jnp.argmax(atom_logits, axis=-1)))
    assert jnp.allclose(lh, ref_h, atol=1e-5)
    assert jnp.allclose(lk, ref_k, atol=1e-5)
    assert jnp.allclose(ll, ref_l, atol=1e-5)

    print("KERNEL_OK")
</pallas_src>

<mosaic_0001>
module attributes {stable_mosaic.version = 11 : i64} {
  func.func @_linear_kernel(%arg0: i32, %arg1: memref<64x128xf32, #tpu.memory_space<vmem>>, %arg2: memref<128x128xbf16, #tpu.memory_space<vmem>>, %arg3: memref<1x128xf32, #tpu.memory_space<vmem>>, %arg4: memref<64x128xbf16, #tpu.memory_space<vmem>>) attributes {dimension_semantics = [#tpu.dimension_semantics<parallel>], iteration_bounds = array<i64: 4>, scalar_prefetch = 0 : i64, scratch_operands = 0 : i64, tpu.core_type = #tpu.core_type<tc>, window_params = [{transform_indices = @transform_0, window_bounds = array<i64: 64, 128>}, {pipeline_mode = #tpu.pipeline_mode<synchronous>, transform_indices = @transform_1, window_bounds = array<i64: 128, 128>}, {pipeline_mode = #tpu.pipeline_mode<synchronous>, transform_indices = @transform_2, window_bounds = array<i64: 1, 128>}, {transform_indices = @transform_3, window_bounds = array<i64: 64, 128>}]} {
    %c0 = arith.constant 0 : index
    %c0_0 = arith.constant 0 : index
    %0 = vector.load %arg1[%c0, %c0_0] : memref<64x128xf32, #tpu.memory_space<vmem>>, vector<64x128xf32>
    %1 = arith.truncf %0 : vector<64x128xf32> to vector<64x128xbf16>
    %c0_1 = arith.constant 0 : index
    %c0_2 = arith.constant 0 : index
    %2 = vector.load %arg2[%c0_1, %c0_2] : memref<128x128xbf16, #tpu.memory_space<vmem>>, vector<128x128xbf16>
    %cst = arith.constant dense<0.000000e+00> : vector<64x128xf32>
    %3 = tpu.matmul %1, %2, %cst {dimension_numbers = #tpu.dot_dimension_numbers<[1], [0], [0], [1], [0, 0, 1, 1], [], []>} : vector<64x128xbf16>, vector<128x128xbf16>, vector<64x128xf32> -> vector<64x128xf32>
    %c0_3 = arith.constant 0 : index
    %c0_4 = arith.constant 0 : index
    %4 = vector.load %arg3[%c0_3, %c0_4] : memref<1x128xf32, #tpu.memory_space<vmem>>, vector<1x128xf32>
    %5 = vector.broadcast %4 : vector<1x128xf32> to vector<64x128xf32>
    %6 = arith.addf %3, %5 : vector<64x128xf32>
    %7 = arith.truncf %6 : vector<64x128xf32> to vector<64x128xbf16>
    %c0_5 = arith.constant 0 : index
    %c0_6 = arith.constant 0 : index
    %8 = vector.load %arg4[%c0_5, %c0_6] : memref<64x128xbf16, #tpu.memory_space<vmem>>, vector<64x128xbf16>
    tpu.vector_store %arg4[%c0_5, %c0_6], %7 {strides = array<i32>} : memref<64x128xbf16, #tpu.memory_space<vmem>>, vector<64x128xbf16>,
    return
  }
  func.func @transform_0(%arg0: i32) -> (i32, i32) {
    %c0_i32 = arith.constant 0 : i32
    %c0_i32_0 = arith.constant 0 : i32
    return %arg0, %c0_i32 : i32, i32
  }
  func.func @transform_1(%arg0: i32) -> (i32, i32) {
    %c0_i32 = arith.constant 0 : i32
    %c0_i32_0 = arith.constant 0 : i32
    %c0_i32_1 = arith.constant 0 : i32
    return %c0_i32, %c0_i32_0 : i32, i32
  }
  func.func @transform_2(%arg0: i32) -> (i32, i32) {
    %c0_i32 = arith.constant 0 : i32
    %c0_i32_0 = arith.constant 0 : i32
    %c0_i32_1 = arith.constant 0 : i32
    return %c0_i32, %c0_i32_0 : i32, i32
  }
  func.func @transform_3(%arg0: i32) -> (i32, i32) {
    %c0_i32 = arith.constant 0 : i32
    %c0_i32_0 = arith.constant 0 : i32
    return %arg0, %c0_i32 : i32, i32
  }
}

</mosaic_0001>

<llo_original>
// kernel: gemnet_t_decoder_forward.1
$region0: #{gemnet_t_decoder_forward.1}
  #allocation0 [shape = 'u32[]', space=smem, size = 0x4, offset = 0x4, fixed_abs, tag = 'smem constant byte address 0x4 - core index']
  #allocation1 [shape = 'u32[144,128]{1,0:T(1,128)}', space=vmem, size = 0x12000, scoped, tag = 'internal scratch']
  %s0 = inlined_call_operand.hbm [shape: f32[200,128], index: 0, kind: input, shape index: {}]
  %s1 = inlined_call_operand.vmem [shape: bf16[128,128], index: 1, kind: input, shape index: {}]
  %s2 = inlined_call_operand.vmem [shape: f32[1,128], index: 2, kind: input, shape index: {}]
  %s3 = inlined_call_operand.hbm [shape: bf16[200,128], index: 3, kind: output, shape index: {}]
  %s4 = sld [smem:[#allocation0]]
  $region49: #{gemnet_t_decoder_forward.1} parent=0
    _
  %s6 = ssub.s32 1, %s4
  %s7 = scalar_select 0, %s6, %s4
  $region1: #{gemnet_t_decoder_forward.1} parent=0
    #allocation2 [shape = 'u8[65536]{0}', space=vmem, size = 0x10000, scoped, tag = 'input window, operand 0']
    #allocation3 [shape = 's32[2]{0}', space=sflag, size = 0x8, scoped, tag = 'scoped memory for gemnet_t_decoder_forward.1']
    #allocation4 [shape = 's32[2]{0}', space=sflag, size = 0x8, scoped, tag = 'scoped memory for gemnet_t_decoder_forward.1']
    #allocation5 [shape = 'u8[32768]{0}', space=vmem, size = 0x8000, scoped, tag = 'output window, operand 0']
    %8 = vsyncpa [#allocation3], 0
    %s9 = scalar_lea.sflag [#allocation3], 1
    %10 = vsyncpa %s9, 0
    %11 = vsyncpa [#allocation4], 0
    %s12 = scalar_lea.sflag [#allocation4], 1
    %13 = vsyncpa %s12, 0
    loop: start=0, step=1, limit=6
    $region2: #{gemnet_t_decoder_forward.1} parent=1 // loop_pre_header
      _
    $region3: #{gemnet_t_decoder_forward.1} parent=1 // loop_header
      %s15 = sphi 0, %s19
      %p16 = scmp.ge.s32.totalorder %s15, 6
      %s25 = sphi 0, %s27
      %s28 = sphi 0, %s25
      %s29 = sphi 0, %s28
      %s45 = sphi 0, %s29
      %s49 = sphi 0, %s49
      %s51 = sphi 0, %s49
      %s52 = sphi 0, %s51
      %s66 = sphi 0, %s52
      %s70 = sphi 0, %s70
      %s72 = sphi 0, %s70
      %s73 = sphi 0, %s72
      %s87 = sphi 0, %s73
      %s93 = sphi 0, %s95
      %s96 = sphi 0, %s93
      %s97 = sphi 0, %s96
      %s113 = sphi 0, %s97
    $region4: #{gemnet_t_decoder_forward.1} parent=1 // loop_header_branch
      %18 = sbr.rel (%p16) target = $region8
    $region5: #{gemnet_t_decoder_forward.1} parent=1 // loop_body
      %s20 = ssub.s32 %s15, 1
      %s21 = ssub.s32 %s15, 2
      %s22 = sadd.s32 %s15, 1
      %s23 = ssub.s32 %s15, %s22
      %p24 = scmp.eq.s32.totalorder %s23, 0
      %s26 = sadd.s32 %s25, 1
      %s27 = scalar_select %p24, %s25, %s26
      %p30 = pneg %p24
      %p31 = scmp.eq.s32.totalorder %s15, 3
      %p32 = por %p30, %p31
      %p33 = scmp.ne.s32.totalorder %s25, %s28
      %p34 = scmp.eq.s32.totalorder %s15, 0
      %p35 = por %p33, %p34
      %p36 = scmp.ne.s32.totalorder %s25, %s28
      %p37 = scmp.eq.s32.totalorder %s20, 3
      %p38 = por %p36, %p37
      %p39 = scmp.ne.s32.totalorder %s28, %s29
      %p40 = scmp.eq.s32.totalorder %s20, 0
      %p41 = por %p39, %p40
      %p42 = scmp.ne.s32.totalorder %s28, %s29
      %p43 = scmp.eq.s32.totalorder %s21, 3
      %p44 = por %p42, %p43
      %p46 = scmp.ne.s32.totalorder %s29, %s45
      %p47 = scmp.eq.s32.totalorder %s21, 0
      %p48 = por %p46, %p47
      %s50 = sadd.s32 %s49, 1
      %p53 = scmp.eq.s32.totalorder %s15, 3
      %p54 = scmp.ne.s32.totalorder %s49, %s51
      %p55 = scmp.eq.s32.totalorder %s15, 0
      %p56 = por %p54, %p55
      %p57 = scmp.ne.s32.totalorder %s49, %s51
      %p58 = scmp.eq.s32.totalorder %s20, 3
      %p59 = por %p57, %p58
      %p60 = scmp.ne.s32.totalorder %s51, %s52
      %p61 = scmp.eq.s32.totalorder %s20, 0
      %p62 = por %p60, %p61
      %p63 = scmp.ne.s32.totalorder %s51, %s52
      %p64 = scmp.eq.s32.totalorder %s21, 3
      %p65 = por %p63, %p64
      %p67 = scmp.ne.s32.totalorder %s52, %s66
      %p68 = scmp.eq.s32.totalorder %s21, 0
      %p69 = por %p67, %p68
      %s71 = sadd.s32 %s70, 1
      %p74 = scmp.eq.s32.totalorder %s15, 3
      %p75 = scmp.ne.s32.totalorder %s70, %s72
      %p76 = scmp.eq.s32.totalorder %s15, 0
      %p77 = por %p75, %p76
      %p78 = scmp.ne.s32.totalorder %s70, %s72
      %p79 = scmp.eq.s32.totalorder %s20, 3
      %p80 = por %p78, %p79
      %p81 = scmp.ne.s32.totalorder %s72, %s73
      %p82 = scmp.eq.s32.totalorder %s20, 0
      %p83 = por %p81, %p82
      %p84 = scmp.ne.s32.totalorder %s72, %s73
      %p85 = scmp.eq.s32.totalorder %s21, 3
      %p86 = por %p84, %p85
      %p88 = scmp.ne.s32.totalorder %s73, %s87
      %p89 = scmp.eq.s32.totalorder %s21, 0
      %p90 = por %p88, %p89
      %s91 = ssub.s32 %s15, %s22
      %p92 = scmp.eq.s32.totalorder %s91, 0
      %s94 = sadd.s32 %s93, 1
      %s95 = scalar_select %p92, %s93, %s94
      %p98 = pneg %p92
      %p99 = scmp.eq.s32.totalorder %s15, 3
      %p100 = por %p98, %p99
      %p101 = scmp.ne.s32.totalorder %s93, %s96
      %p102 = scmp.eq.s32.totalorder %s15, 0
      %p103 = por %p101, %p102
      %p104 = scmp.ne.s32.totalorder %s93, %s96
      %p105 = scmp.eq.s32.totalorder %s20, 3
      %p106 = por %p104, %p105
      %p107 = scmp.ne.s32.totalorder %s96, %s97
      %p108 = scmp.eq.s32.totalorder %s20, 0
      %p109 = por %p107, %p108
      %p110 = scmp.ne.s32.totalorder %s96, %s97
      %p111 = scmp.eq.s32.totalorder %s21, 3
      %p112 = por %p110, %p111
      %p114 = scmp.ne.s32.totalorder %s97, %s113
      %p115 = scmp.eq.s32.totalorder %s21, 0
      %p116 = por %p114, %p115
      %p117 = scmp.le.s32.totalorder 1, %s15
      %p118 = scmp.lt.s32.totalorder %s15, 5
      %p119 = pnand %p117, %p118
      %p120 = pneg %p119
      // Predicated region
      $region9: #{gemnet_t_decoder_forward.1} parent=5 // pred_check
        _
      $region10: #{gemnet_t_decoder_forward.1} parent=5 // pred_check_branch
        %122 = sbr.rel (%p119) target = $region12
      $region11: #{gemnet_t_decoder_forward.1} parent=5 // pred_region
        %s123 = ssub.s32 %s15, 1
        // Predicated region
        $region13: #{gemnet_t_decoder_forward.1} parent=11 // pred_check
          %p124 = pneg %p62
        $region14: #{gemnet_t_decoder_forward.1} parent=11 // pred_check_branch
          %126 = sbr.rel (%p124) target = $region16
        $region15: #{gemnet_t_decoder_forward.1} parent=11 // pred_region
          _
        $region16: #{gemnet_t_decoder_forward.1} parent=11 // pred_fallthru
          _
        // Predicated region
        $region17: #{gemnet_t_decoder_forward.1} parent=11 // pred_check
          %p127 = pneg %p83
        $region18: #{gemnet_t_decoder_forward.1} parent=11 // pred_check_branch
          %129 = sbr.rel (%p127) target = $region20
        $region19: #{gemnet_t_decoder_forward.1} parent=11 // pred_region
          _
        $region20: #{gemnet_t_decoder_forward.1} parent=11 // pred_fallthru
          _
      $region12: #{gemnet_t_decoder_forward.1} parent=5 // pred_fallthru
        _
      %p130 = scmp.lt.s32.totalorder %s15, 4
      // Predicated region
      $region21: #{gemnet_t_decoder_forward.1} parent=5 // pred_check
        %p131 = pneg %p130
      $region22: #{gemnet_t_decoder_forward.1} parent=5 // pred_check_branch
        %133 = sbr.rel (%p131) target = $region24
      $region23: #{gemnet_t_decoder_forward.1} parent=5 // pred_region
        // Predicated region
        $region25: #{gemnet_t_decoder_forward.1} parent=23 // pred_check
          %p134 = pneg %p35
        $region26: #{gemnet_t_decoder_forward.1} parent=23 // pred_check_branch
          %136 = sbr.rel (%p134) target = $region28
        $region27: #{gemnet_t_decoder_forward.1} parent=23 // pred_region
          %s137 = sand.u32 %s25, 1
          %s138 = scalar_lea.sflag [#allocation3], %s137
          %s139 = sand.u32 %s25, 1
          %s140 = smul.addr %s139, 64
          %s141 = scalar_lea.vmem [#allocation2], %s140
          %s142 = smul.u32 8, %s15
          %s143 = ssub.s32 25, %s142
          %p144 = scmp.lt.s32.totalorder %s143, 8
          %s145 = scalar_select %p144, %s143, 8
          %s146 = smul.u32 128, %s145
          %s148 = ssub.s32 1024, %s146
          %149 = vsyncadd %s138, %s148
          %p150 = scmp.ne.s32.totalorder 0, %s146
          %s151 = smul.addr %s142, 128
          %s152 = scalar_lea.hbm %s0, %s151
          %s153 = smul.u32 8, %s145
          %s154 = sshll.u32 %s141, 4
          %s155 = int_to_ptr.vmem [resolvable:$true] %s154
          %s156 = sshll.u32 %s153, 4
          %160 = dma.hbm_to_vmem [thread:$0]  (%p150), %s152, %s156, %s155, %s138, 128, 128, 8
        $region28: #{gemnet_t_decoder_forward.1} parent=23 // pred_fallthru
          _
      $region24: #{gemnet_t_decoder_forward.1} parent=5 // pred_fallthru
        _
      %p161 = scmp.le.s32.totalorder 1, %s15
      %p162 = scmp.lt.s32.totalorder %s15, 5
      %p163 = pnand %p161, %p162
      %p164 = pneg %p163
      // Predicated region
      $region29: #{gemnet_t_decoder_forward.1} parent=5 // pred_check
        _
      $region30: #{gemnet_t_decoder_forward.1} parent=5 // pred_check_branch
        %166 = sbr.rel (%p163) target = $region32
      $region31: #{gemnet_t_decoder_forward.1} parent=5 // pred_region
        %s167 = ssub.s32 %s15, 1
        %s168 = sand.u32 %s28, 1
        %s169 = scalar_lea.sflag [#allocation3], %s168
        %s170 = sand.u32 %s28, 1
        %s171 = smul.addr %s170, 64
        %s172 = scalar_lea.vmem [#allocation2], %s171
        // Predicated region
        $region33: #{gemnet_t_decoder_forward.1} parent=31 // pred_check
          %p173 = pneg %p41
        $region34: #{gemnet_t_decoder_forward.1} parent=31 // pred_check_branch
          %175 = sbr.rel (%p173) target = $region36
        $region35: #{gemnet_t_decoder_forward.1} parent=31 // pred_region
          %176 = dma.done %s169, 1024
        $region36: #{gemnet_t_decoder_forward.1} parent=31 // pred_fallthru
          _
        %s177 = sand.u32 %s28, 1
        %s178 = scalar_lea.sflag [#allocation3], %s177
        %s179 = sand.u32 %s28, 1
        %s180 = smul.addr %s179, 64
        %s181 = scalar_lea.vmem [#allocation2], %s180
        %p182 = pneg %p41
        %p183 = pneg %p38
        %p184 = pneg %p62
        %p185 = pneg %p59
        %p186 = pneg %p83
        %p187 = pneg %p80
        %p188 = pneg %p109
        %p189 = pneg %p106
        %s190 = sand.u32 %s96, 1
        %s191 = scalar_lea.sflag [#allocation4], %s190
        %s192 = sand.u32 %s96, 1
        %s193 = smul.addr %s192, 32
        %s194 = scalar_lea.vmem [#allocation5], %s193
        %s195 = smul.u32 8, %s20
        %s196 = ssub.s32 25, %s195
        %p197 = scmp.lt.s32.totalorder %s196, 8
        %s198 = scalar_select %p197, %s196, 8
        %s199 = smul.u32 128, %s198
        %s200 = smul.u32 8, %s20
        %s201 = ssub.s32 25, %s200
        %p202 = scmp.lt.s32.totalorder %s201, 8
        %s203 = scalar_select %p202, %s201, 8
        %s204 = smul.u32 64, %s203
        %v206 = vld [vmem:[%s172] sm:$0xff]
        %v207 = vld [vmem:[%s172 + $0x8] sm:$0xff]
        %v208 = vld [vmem:[%s172 + $0x10] sm:$0xff]
        %v209 = vld [vmem:[%s172 + $0x18] sm:$0xff]
        %v210 = vld [vmem:[%s172 + $0x20] sm:$0xff]
        %v211 = vld [vmem:[%s172 + $0x28] sm:$0xff]
        %v212 = vld [vmem:[%s172 + $0x30] sm:$0xff]
        %v213 = vld [vmem:[%s172 + $0x38] sm:$0xff]
        %v214 = vpack.c.bf16 %v207, %v206
        %v215 = vpack.c.bf16 %v209, %v208
        %v216 = vpack.c.bf16 %v211, %v210
        %v217 = vpack.c.bf16 %v213, %v212
        %v218 = vld [vmem:[%s1] sm:$0xf]
        %v219 = vld [vmem:[%s1 + $0x4] sm:$0xf]
        %v220 = vld [vmem:[%s1 + $0x8] sm:$0xf]
        %v221 = vld [vmem:[%s1 + $0xc] sm:$0xf]
        %v222 = vld [vmem:[%s1 + $0x10] sm:$0xf]
        %v223 = vld [vmem:[%s1 + $0x14] sm:$0xf]
        %v224 = vld [vmem:[%s1 + $0x18] sm:$0xf]
        %v225 = vld [vmem:[%s1 + $0x1c] sm:$0xf]
        %v226 = vld [vmem:[%s1 + $0x20] sm:$0xf]
        %v227 = vld [vmem:[%s1 + $0x24] sm:$0xf]
        %v228 = vld [vmem:[%s1 + $0x28] sm:$0xf]
        %v229 = vld [vmem:[%s1 + $0x2c] sm:$0xf]
        %v230 = vld [vmem:[%s1 + $0x30] sm:$0xf]
        %v231 = vld [vmem:[%s1 + $0x34] sm:$0xf]
        %v232 = vld [vmem:[%s1 + $0x38] sm:$0xf]
        %v233 = vld [vmem:[%s1 + $0x3c] sm:$0xf]
        %v234 = vld [vmem:[%s2] sm:$0x1]
        %v236 = vlaneseq
        %v237 = vshrl.u32 %v236, 7
        %v238 = vsub.s32 0, %v237
        %v239 = vrot.slane %v234, %v238
        %v257 = vunpack.c.l.b16 %v218
        %v258 = vunpack.c.l.b16 %v219
        %v259 = vunpack.c.l.b16 %v220
        %v260 = vunpack.c.l.b16 %v221
        %v261 = vunpack.c.l.b16 %v222
        %v262 = vunpack.c.l.b16 %v223
        %v263 = vunpack.c.l.b16 %v224
        %v264 = vunpack.c.l.b16 %v225
        %v265 = vunpack.c.l.b16 %v226
        %v266 = vunpack.c.l.b16 %v227
        %v267 = vunpack.c.l.b16 %v228
        %v268 = vunpack.c.l.b16 %v229
        %v269 = vunpack.c.l.b16 %v230
        %v270 = vunpack.c.l.b16 %v231
        %v271 = vunpack.c.l.b16 %v232
        %v272 = vunpack.c.l.b16 %v233
        %v273 = vpack.c.b16 %v258, %v257
        %v274 = vpack.c.b16 %v260, %v259
        %v275 = vpack.c.b16 %v262, %v261
        %v276 = vpack.c.b16 %v264, %v263
        %v277 = vpack.c.b16 %v266, %v265
        %v278 = vpack.c.b16 %v268, %v267
        %v279 = vpack.c.b16 %v270, %v269
        %v280 = vpack.c.b16 %v272, %v271
        %289 = vmatprep.subr.bf16.mxu0 0
        %290 = vmatpush1.bf16.msra.mxu0 %v273
        %291 = vmatprep.subr.bf16.mxu0 0
        %292 = vmatpush1.bf16.msra.mxu0 %v274
        %293 = vmatprep.subr.bf16.mxu0 0
        %294 = vmatpush1.bf16.msra.mxu0 %v275
        %295 = vmatprep.subr.bf16.mxu0 0
        %296 = vmatpush1.bf16.msra.mxu0 %v276
        %297 = vmatprep.subr.bf16.mxu0 0
        %298 = vmatpush1.bf16.msra.mxu0 %v277
        %299 = vmatprep.subr.bf16.mxu0 0
        %300 = vmatpush1.bf16.msra.mxu0 %v278
        %301 = vmatprep.subr.bf16.mxu0 0
        %302 = vmatpush1.bf16.msra.mxu0 %v279
        %303 = vmatprep.subr.bf16.mxu0 0
        %304 = vmatpush1.bf16.msra.mxu0 %v280
        %305 = vmatprep.subr.bf16.mxu0 0
        %306 = vmatpush1.bf16.msra.mxu0 0
        %307 = vmatprep.subr.bf16.mxu0 0
        %308 = vmatpush1.bf16.msra.mxu0 0
        %309 = vmatprep.subr.bf16.mxu0 0
        %310 = vmatpush1.bf16.msra.mxu0 0
        %311 = vmatprep.subr.bf16.mxu0 0
        %312 = vmatpush1.bf16.msra.mxu0 0
        %313 = vmatprep.subr.bf16.mxu0 0
        %314 = vmatpush1.bf16.msra.mxu0 0
        %315 = vmatprep.subr.bf16.mxu0 0
        %316 = vmatpush1.bf16.msra.mxu0 0
        %317 = vmatprep.subr.bf16.mxu0 0
        %318 = vmatpush1.bf16.msra.mxu0 0
        %319 = vmatprep.subr.bf16.mxu0 0
        %320 = vmatpush1.bf16.msra.mxu0 0
        %321 = vmatprep.mubr.bf16.mxu0 0
        %322 = vmatmul.mubr.bf16.gmra.mrb[0].mxu0 %v214
        %v323 = vpop.f32.mrb[0].mxu0
        %v324 = vadd.f32 %v239, %v323
        %v325 = vpop.f32.mrb[0].mxu0
        %v326 = vpop.f32.mrb[0].mxu0
        %v327 = vadd.f32 %v239, %v326
        %v328 = vpop.f32.mrb[0].mxu0
        %329 = vmatprep.mubr.bf16.mxu0 0
        %330 = vmatmul.mubr.bf16.gmra.mrb[0].mxu0 %v215
        %v331 = vpop.f32.mrb[0].mxu0
        %v332 = vadd.f32 %v239, %v331
        %v333 = vpop.f32.mrb[0].mxu0
        %v334 = vpop.f32.mrb[0].mxu0
        %v335 = vadd.f32 %v239, %v334
        %v336 = vpop.f32.mrb[0].mxu0
        %337 = vmatprep.mubr.bf16.mxu0 0
        %338 = vmatmul.mubr.bf16.gmra.mrb[0].mxu0 %v216
        %v339 = vpop.f32.mrb[0].mxu0
        %v340 = vadd.f32 %v239, %v339
        %v341 = vpop.f32.mrb[0].mxu0
        %v342 = vpop.f32.mrb[0].mxu0
        %v343 = vadd.f32 %v239, %v342
        %v344 = vpop.f32.mrb[0].mxu0
        %345 = vmatprep.mubr.bf16.mxu0 0
        %346 = vmatmul.mubr.bf16.gmra.mrb[0].mxu0 %v217
        %v347 = vpop.f32.mrb[0].mxu0
        %v348 = vadd.f32 %v239, %v347
        %v349 = vpop.f32.mrb[0].mxu0
        %v350 = vpop.f32.mrb[0].mxu0
        %v351 = vadd.f32 %v239, %v350
        %v352 = vpop.f32.mrb[0].mxu0
        %353 = vdwg.mxu0
        %v354 = vpack.c.bf16 %v327, %v324
        %v355 = vpack.c.bf16 %v335, %v332
        %v356 = vpack.c.bf16 %v343, %v340
        %v357 = vpack.c.bf16 %v351, %v348
        %v362 = vunpack.c.l.b16 %v354
        %v363 = vunpack.c.h.b16 %v354
        %v364 = vunpack.c.l.b16 %v355
        %v365 = vunpack.c.h.b16 %v355
        %v366 = vunpack.c.l.b16 %v356
        %v367 = vunpack.c.h.b16 %v356
        %v368 = vunpack.c.l.b16 %v357
        %v369 = vunpack.c.h.b16 %v357
        %v370 = vpack.c.b16 %v362, %v362
        %v371 = vpack.c.b16 %v363, %v363
        %v372 = vpack.c.b16 %v364, %v364
        %v373 = vpack.c.b16 %v365, %v365
        %v374 = vpack.c.b16 %v366, %v366
        %v375 = vpack.c.b16 %v367, %v367
        %v376 = vpack.c.b16 %v368, %v368
        %v377 = vpack.c.b16 %v369, %v369
        %386 = vst [vmem:[%s194] sm:$0xf] %v370
        %387 = vst [vmem:[%s194 + $0x4] sm:$0xf] %v371
        %388 = vst [vmem:[%s194 + $0x8] sm:$0xf] %v372
        %389 = vst [vmem:[%s194 + $0xc] sm:$0xf] %v373
        %390 = vst [vmem:[%s194 + $0x10] sm:$0xf] %v374
        %391 = vst [vmem:[%s194 + $0x14] sm:$0xf] %v375
        %392 = vst [vmem:[%s194 + $0x18] sm:$0xf] %v376
        %393 = vst [vmem:[%s194 + $0x1c] sm:$0xf] %v377
        %s394 = sand.u32 %s96, 1
        %s395 = scalar_lea.sflag [#allocation4], %s394
        %s396 = sand.u32 %s96, 1
        %s397 = smul.addr %s396, 32
        %s398 = scalar_lea.vmem [#allocation5], %s397
        // Predicated region
        $region37: #{gemnet_t_decoder_forward.1} parent=31 // pred_check
          %p399 = pneg %p106
        $region38: #{gemnet_t_decoder_forward.1} parent=31 // pred_check_branch
          %401 = sbr.rel (%p399) target = $region40
        $region39: #{gemnet_t_decoder_forward.1} parent=31 // pred_region
          %s402 = smul.u32 8, %s20
          %s403 = ssub.s32 25, %s402
          %p404 = scmp.lt.s32.totalorder %s403, 8
          %s405 = scalar_select %p404, %s403, 8
          %s406 = smul.u32 64, %s405
          %s408 = ssub.s32 512, %s406
          %409 = vsyncadd %s395, %s408
          %p410 = scmp.ne.s32.totalorder 0, %s406
          %s411 = smul.addr %s402, 64
          %s412 = scalar_lea.hbm %s3, %s411
          %s413 = smul.u32 4, %s405
          %s414 = sshll.u32 %s398, 4
          %s415 = int_to_ptr.vmem [resolvable:$true] %s414
          %s416 = sshll.u32 %s413, 4
          %420 = dma.vmem_to_hbm [thread:$0]  (%p410), %s415, %s416, %s412, %s395, 64, 64, 4
        $region40: #{gemnet_t_decoder_forward.1} parent=31 // pred_fallthru
          _
      $region32: #{gemnet_t_decoder_forward.1} parent=5 // pred_fallthru
        _
      %p421 = scmp.le.s32.totalorder 2, %s15
      // Predicated region
      $region41: #{gemnet_t_decoder_forward.1} parent=5 // pred_check
        %p422 = pneg %p421
      $region42: #{gemnet_t_decoder_forward.1} parent=5 // pred_check_branch
        %424 = sbr.rel (%p422) target = $region44
      $region43: #{gemnet_t_decoder_forward.1} parent=5 // pred_region
        %s425 = ssub.s32 %s15, 2
        // Predicated region
        $region45: #{gemnet_t_decoder_forward.1} parent=43 // pred_check
          %p426 = pneg %p112
        $region46: #{gemnet_t_decoder_forward.1} parent=43 // pred_check_branch
          %428 = sbr.rel (%p426) target = $region48
        $region47: #{gemnet_t_decoder_forward.1} parent=43 // pred_region
          %s429 = sand.u32 %s97, 1
          %s430 = scalar_lea.sflag [#allocation4], %s429
          %s431 = sand.u32 %s97, 1
          %s432 = smul.addr %s431, 32
          %s433 = scalar_lea.vmem [#allocation5], %s432
          %434 = dma.done %s430, 512
        $region48: #{gemnet_t_decoder_forward.1} parent=43 // pred_fallthru
          _
      $region44: #{gemnet_t_decoder_forward.1} parent=5 // pred_fallthru
        _
    $region6: #{gemnet_t_decoder_forward.1} parent=1 // loop_footer
      %s19 = sadd.s32 1, %s15
    $region7: #{gemnet_t_decoder_forward.1} parent=1 // loop_footer_branch
      %14 = sbr.rel target = $region3
    $region8: #{gemnet_t_decoder_forward.1} parent=1 // loop_exit
      _
    %435 = vsyncpa [#allocation3], 1
    %s436 = scalar_lea.sflag [#allocation3], 1
    %437 = vsyncpa %s436, 1
    %438 = vsyncpa [#allocation4], 1
    %s439 = scalar_lea.sflag [#allocation4], 1
    %440 = vsyncpa %s439, 1

</llo_original>
